<compile_context>
chip_gen: v6e
topology: v6e:2x2x1
jax: 0.10.0
libtpu: 0.0.40
codegen_flags: <defaults>
</compile_context>

<pallas_src>
import functools

import jax
import jax.numpy as jnp
from jax.experimental import pallas as pl
from jax.experimental.pallas import tpu as pltpu

_EPS = 1e-12  # clamp for -log() (g or p_true can numerically hit 0)


def _round_up(x, m):
    return ((x + m - 1) // m) * m


def _lce_kernel(y_pred_ref, g_ref, y_true_ref, loss_t_ref, loss_g_ref, acc_ref,
                *, batch, tile_b):
    i = pl.program_id(0)
    nb = pl.num_programs(0)

    @pl.when(i == 0)
    def _init():
        acc_ref[0] = 0.0
        acc_ref[1] = 0.0

    y_pred = y_pred_ref[...]          # (TILE_B, C_pad), native dtype
    g = g_ref[...]                    # (TILE_B, 1) f32
    labels = y_true_ref[...]          # (TILE_B, 1) i32

    tb, cp = y_pred.shape
    # Masked row-gather of the predicted prob at the true class (no one-hot
    # interpolation of the full (B, C) tile).  Padded class lanes never match.
    col = jax.lax.broadcasted_iota(jnp.int32, (tb, cp), 1)
    p = jnp.sum(jnp.where(col == labels, y_pred, jnp.zeros_like(y_pred)),
                axis=-1, keepdims=True).astype(jnp.float32)       # (TILE_B, 1)

    # p_true = g * p + (1 - g) * 1   (algebraic form of the one-hot interp)
    p_true = g * p + (1.0 - g)

    # Mask rows that are only batch padding (last block may be ragged).
    row = i * tile_b + jax.lax.broadcasted_iota(jnp.int32, (tb, 1), 0)
    valid = row < batch
    p_safe = jnp.where(valid, jnp.maximum(p_true, _EPS), 1.0)
    g_safe = jnp.where(valid, jnp.maximum(g, _EPS), 1.0)

    acc_ref[0] += jnp.sum(-jnp.log(p_safe))
    acc_ref[1] += jnp.sum(-jnp.log(g_safe))

    @pl.when(i == nb - 1)
    def _finalize():
        inv_b = 1.0 / batch
        loss_t_ref[0, 0] = acc_ref[0] * inv_b
        loss_g_ref[0, 0] = acc_ref[1] * inv_b


@jax.jit
def lce_losses(y_pred, g, y_true):
    """Returns (loss_t, loss_g) as f32 scalars, computed in one Pallas kernel."""
    B, C = y_pred.shape
    itemsize = jnp.dtype(y_pred.dtype).itemsize

    # Lane-dense class axis: pad C to a multiple of 128.
    C_pad = _round_up(max(C, 128), 128)

    # Batch tile: multiple of 8, ~4 MiB per y_pred block (double-buffered it
    # stays well inside the scoped-VMEM budget on v5e/v6e/v7x).
    target_bytes = 4 * 1024 * 1024
    rows = max(8, (target_bytes // (C_pad * itemsize)) // 8 * 8)
    tile_b = int(min(rows, _round_up(B, 8), 1024))
    B_pad = _round_up(B, tile_b)
    nb = B_pad // tile_b

    yp = jnp.pad(y_pred, ((0, B_pad - B), (0, C_pad - C)))
    g2 = jnp.pad(g.reshape(B, 1).astype(jnp.float32),
                 ((0, B_pad - B), (0, 0)), constant_values=1.0)
    lab2 = jnp.pad(y_true.reshape(B, 1).astype(jnp.int32),
                   ((0, B_pad - B), (0, 0)))

    kernel = functools.partial(_lce_kernel, batch=B, tile_b=tile_b)

    loss_t, loss_g = pl.pallas_call(
        kernel,
        grid=(nb,),
        in_specs=[
            pl.BlockSpec((tile_b, C_pad), lambda i: (i, 0)),  # y_pred tile
            pl.BlockSpec((tile_b, 1), lambda i: (i, 0)),      # g tile
            pl.BlockSpec((tile_b, 1), lambda i: (i, 0)),      # labels tile
        ],
        out_specs=(
            pl.BlockSpec(memory_space=pltpu.MemorySpace.SMEM),
            pl.BlockSpec(memory_space=pltpu.MemorySpace.SMEM),
        ),
        out_shape=(
            jax.ShapeDtypeStruct((1, 1), jnp.float32),
            jax.ShapeDtypeStruct((1, 1), jnp.float32),
        ),
        scratch_shapes=[pltpu.SMEM((2,), jnp.float32)],
        compiler_params=pltpu.CompilerParams(
            dimension_semantics=("arbitrary",),
            vmem_limit_bytes=32 * 1024 * 1024,
        ),
        cost_estimate=pl.CostEstimate(
            flops=3 * B * C + 8 * B,
            transcendentals=2 * B,
            bytes_accessed=B * C * itemsize + 8 * B + 8,
        ),
    )(yp, g2, lab2)
    return loss_t[0, 0], loss_g[0, 0]


class LCE:
    """JAX/Pallas port of the PyTorch LCE module (criterion = NLL on probs)."""

    def __init__(self, lamb_init, beta, adjust_factor=1.01):
        self.lamb = float(lamb_init)
        self.beta = float(beta)
        self.adjust_factor = float(adjust_factor)

    def forward(self, y_pred, g, y_true):
        loss_t, loss_g = lce_losses(y_pred, g, y_true)
        loss = loss_t + self.lamb * loss_g
        # Host-side lamb update, mirroring `.item()` + python branch in torch.
        self.update_lamb(float(jax.device_get(loss_g)))
        return loss

    def update_lamb(self, loss_g):
        if loss_g > self.beta:
            self.lamb = self.lamb * self.adjust_factor
        elif loss_g < self.beta:
            self.lamb = self.lamb / self.adjust_factor

    __call__ = forward


if __name__ == "__main__":
    # Small deterministic inputs: batch=8, classes=32.
    B, C = 8, 32
    key = jax.random.PRNGKey(0)
    k1, k2, k3 = jax.random.split(key, 3)

    logits = jax.random.normal(k1, (B, C), dtype=jnp.float32)
    y_pred = jax.nn.softmax(logits, axis=-1)                             # probs
    g = jax.nn.sigmoid(jax.random.normal(k2, (B,), dtype=jnp.float32))   # (0,1)
    y_true = jax.random.randint(k3, (B,), 0, C, dtype=jnp.int32)

    lce = LCE(lamb_init=0.1, beta=0.3, adjust_factor=1.01)
    loss = lce(y_pred, g, y_true)
    loss = jax.block_until_ready(loss)

    # Pure-JAX reference check.
    onehot = jax.nn.one_hot(y_true, C, dtype=jnp.float32)
    y = g[:, None] * y_pred + (1.0 - g[:, None]) * onehot
    loss_t_ref = jnp.mean(-jnp.log(jnp.sum(y * onehot, axis=-1)))
    loss_g_ref = jnp.mean(-jnp.log(g))
    loss_ref = loss_t_ref + 0.1 * loss_g_ref
    assert jnp.allclose(loss, loss_ref, rtol=1e-5, atol=1e-5), (loss, loss_ref)

    print("KERNEL_OK")
</pallas_src>

<mosaic_0001>
module attributes {stable_mosaic.version = 11 : i64} {
  func.func @_lce_kernel(%arg0: i32, %arg1: memref<8x128xf32, #tpu.memory_space<vmem>>, %arg2: memref<8x1xf32, #tpu.memory_space<vmem>>, %arg3: memref<8x1xi32, #tpu.memory_space<vmem>>, %arg4: memref<1x1xf32, #tpu.memory_space<smem>>, %arg5: memref<1x1xf32, #tpu.memory_space<smem>>, %arg6: memref<2xf32, #tpu.memory_space<smem>>) attributes {dimension_semantics = [#tpu.dimension_semantics<arbitrary>], iteration_bounds = array<i64: 1>, scalar_prefetch = 0 : i64, scratch_operands = 1 : i64, tpu.core_type = #tpu.core_type<tc>, window_params = [{transform_indices = @transform_0, window_bounds = array<i64: 8, 128>}, {transform_indices = @transform_1, window_bounds = array<i64: 8, 1>}, {transform_indices = @transform_2, window_bounds = array<i64: 8, 1>}, {transform_indices = @transform_3, window_bounds = array<i64: 1, 1>}, {transform_indices = @transform_4, window_bounds = array<i64: 1, 1>}]} {
    %c0_i32 = arith.constant 0 : i32
    %0 = arith.cmpi eq, %arg0, %c0_i32 : i32
    %1 = arith.extui %0 : i1 to i32
    %c0_i32_0 = arith.constant 0 : i32
    %2 = arith.cmpi ne, %1, %c0_i32_0 : i32
    scf.if %2 {
      %cst_22 = arith.constant 0.000000e+00 : f32
      %c0_23 = arith.constant 0 : index
      %54 = memref.load %arg6[%c0_23] : memref<2xf32, #tpu.memory_space<smem>>
      memref.store %cst_22, %arg6[%c0_23] : memref<2xf32, #tpu.memory_space<smem>>
      %cst_24 = arith.constant 0.000000e+00 : f32
      %c1_25 = arith.constant 1 : index
      %55 = memref.load %arg6[%c1_25] : memref<2xf32, #tpu.memory_space<smem>>
      memref.store %cst_24, %arg6[%c1_25] : memref<2xf32, #tpu.memory_space<smem>>
    } else {
    }
    %c0 = arith.constant 0 : index
    %c0_1 = arith.constant 0 : index
    %3 = vector.load %arg1[%c0, %c0_1] : memref<8x128xf32, #tpu.memory_space<vmem>>, vector<8x128xf32>
    %c0_2 = arith.constant 0 : index
    %c0_3 = arith.constant 0 : index
    %4 = vector.load %arg2[%c0_2, %c0_3] : memref<8x1xf32, #tpu.memory_space<vmem>>, vector<8x1xf32>
    %c0_4 = arith.constant 0 : index
    %c0_5 = arith.constant 0 : index
    %5 = vector.load %arg3[%c0_4, %c0_5] : memref<8x1xi32, #tpu.memory_space<vmem>>, vector<8x1xi32>
    %6 = tpu.iota {dimensions = array<i32: 1>} : vector<8x128xi32>
    %7 = vector.broadcast %5 : vector<8x1xi32> to vector<8x128xi32>
    %8 = arith.cmpi eq, %6, %7 : vector<8x128xi32>
    %cst = arith.constant 0.000000e+00 : f32
    %9 = vector.broadcast %cst : f32 to vector<8x128xf32>
    %10 = arith.select %8, %3, %9 : vector<8x128xi1>, vector<8x128xf32>
    %cst_6 = arith.constant dense<0.000000e+00> : vector<8xf32>
    %11 = vector.multi_reduction <add>, %10, %cst_6 [1] : vector<8x128xf32> to vector<8xf32>
    %12 = vector.shape_cast %11 : vector<8xf32> to vector<8x1xf32>
    %13 = arith.mulf %4, %12 : vector<8x1xf32>
    %cst_7 = arith.constant 1.000000e+00 : f32
    %14 = vector.broadcast %cst_7 : f32 to vector<8x1xf32>
    %15 = arith.subf %14, %4 : vector<8x1xf32>
    %16 = arith.addf %13, %15 : vector<8x1xf32>
    %c8_i32 = arith.constant 8 : i32
    %17 = arith.muli %arg0, %c8_i32 : i32
    %18 = tpu.iota {dimensions = array<i32: 0>} : vector<8x1xi32>
    %19 = vector.broadcast %17 : i32 to vector<8x1xi32>
    %20 = arith.addi %19, %18 : vector<8x1xi32>
    %c8_i32_8 = arith.constant 8 : i32
    %21 = vector.broadcast %c8_i32_8 : i32 to vector<8x1xi32>
    %22 = arith.cmpi slt, %20, %21 : vector<8x1xi32>
    %cst_9 = arith.constant 9.99999996E-13 : f32
    %23 = vector.broadcast %cst_9 : f32 to vector<8x1xf32>
    %24 = arith.maximumf %16, %23 : vector<8x1xf32>
    %cst_10 = arith.constant 1.000000e+00 : f32
    %25 = vector.broadcast %cst_10 : f32 to vector<8x1xf32>
    %26 = arith.select %22, %24, %25 : vector<8x1xi1>, vector<8x1xf32>
    %cst_11 = arith.constant 9.99999996E-13 : f32
    %27 = vector.broadcast %cst_11 : f32 to vector<8x1xf32>
    %28 = arith.maximumf %4, %27 : vector<8x1xf32>
    %cst_12 = arith.constant 1.000000e+00 : f32
    %29 = vector.broadcast %cst_12 : f32 to vector<8x1xf32>
    %30 = arith.select %22, %28, %29 : vector<8x1xi1>, vector<8x1xf32>
    %c0_13 = arith.constant 0 : index
    %31 = memref.load %arg6[%c0_13] : memref<2xf32, #tpu.memory_space<smem>>
    %32 = math.log %26 : vector<8x1xf32>
    %cst_14 = arith.constant 0.000000e+00 : f32
    %33 = vector.broadcast %cst_14 : f32 to vector<8x1xf32>
    %34 = arith.subf %33, %32 : vector<8x1xf32>
    %35 = vector.shape_cast %34 : vector<8x1xf32> to vector<1x8x1xf32>
    %cst_15 = arith.constant dense<0.000000e+00> : vector<1xf32>
    %36 = vector.multi_reduction <add>, %35, %cst_15 [1, 2] : vector<1x8x1xf32> to vector<1xf32>
    %37 = vector.shape_cast %36 : vector<1xf32> to vector<1x1x1xf32>
    %38 = vector.extract %37[0, 0, 0] : f32 from vector<1x1x1xf32>
    %39 = arith.addf %31, %38 : f32
    %c0_16 = arith.constant 0 : index
    %40 = memref.load %arg6[%c0_16] : memref<2xf32, #tpu.memory_space<smem>>
    memref.store %39, %arg6[%c0_16] : memref<2xf32, #tpu.memory_space<smem>>
    %c1 = arith.constant 1 : index
    %41 = memref.load %arg6[%c1] : memref<2xf32, #tpu.memory_space<smem>>
    %42 = math.log %30 : vector<8x1xf32>
    %cst_17 = arith.constant 0.000000e+00 : f32
    %43 = vector.broadcast %cst_17 : f32 to vector<8x1xf32>
    %44 = arith.subf %43, %42 : vector<8x1xf32>
    %45 = vector.shape_cast %44 : vector<8x1xf32> to vector<1x8x1xf32>
    %cst_18 = arith.constant dense<0.000000e+00> : vector<1xf32>
    %46 = vector.multi_reduction <add>, %45, %cst_18 [1, 2] : vector<1x8x1xf32> to vector<1xf32>
    %47 = vector.shape_cast %46 : vector<1xf32> to vector<1x1x1xf32>
    %48 = vector.extract %47[0, 0, 0] : f32 from vector<1x1x1xf32>
    %49 = arith.addf %41, %48 : f32
    %c1_19 = arith.constant 1 : index
    %50 = memref.load %arg6[%c1_19] : memref<2xf32, #tpu.memory_space<smem>>
    memref.store %49, %arg6[%c1_19] : memref<2xf32, #tpu.memory_space<smem>>
    %c0_i32_20 = arith.constant 0 : i32
    %51 = arith.cmpi eq, %arg0, %c0_i32_20 : i32
    %52 = arith.extui %51 : i1 to i32
    %c0_i32_21 = arith.constant 0 : i32
    %53 = arith.cmpi ne, %52, %c0_i32_21 : i32
    scf.if %53 {
      %c0_22 = arith.constant 0 : index
      %54 = memref.load %arg6[%c0_22] : memref<2xf32, #tpu.memory_space<smem>>
      %cst_23 = arith.constant 1.250000e-01 : f32
      %55 = arith.mulf %54, %cst_23 : f32
      %c0_24 = arith.constant 0 : index
      %c0_25 = arith.constant 0 : index
      %56 = memref.load %arg4[%c0_24, %c0_25] : memref<1x1xf32, #tpu.memory_space<smem>>
      memref.store %55, %arg4[%c0_24, %c0_25] : memref<1x1xf32, #tpu.memory_space<smem>>
      %c1_26 = arith.constant 1 : index
      %57 = memref.load %arg6[%c1_26] : memref<2xf32, #tpu.memory_space<smem>>
      %cst_27 = arith.constant 1.250000e-01 : f32
      %58 = arith.mulf %57, %cst_27 : f32
      %c0_28 = arith.constant 0 : index
      %c0_29 = arith.constant 0 : index
      %59 = memref.load %arg5[%c0_28, %c0_29] : memref<1x1xf32, #tpu.memory_space<smem>>
      memref.store %58, %arg5[%c0_28, %c0_29] : memref<1x1xf32, #tpu.memory_space<smem>>
    } else {
    }
    return
  }
  func.func @transform_0(%arg0: i32) -> (i32, i32) {
    %c0_i32 = arith.constant 0 : i32
    %c0_i32_0 = arith.constant 0 : i32
    return %arg0, %c0_i32 : i32, i32
  }
  func.func @transform_1(%arg0: i32) -> (i32, i32) {
    %c0_i32 = arith.constant 0 : i32
    %c0_i32_0 = arith.constant 0 : i32
    return %arg0, %c0_i32 : i32, i32
  }
  func.func @transform_2(%arg0: i32) -> (i32, i32) {
    %c0_i32 = arith.constant 0 : i32
    %c0_i32_0 = arith.constant 0 : i32
    return %arg0, %c0_i32 : i32, i32
  }
  func.func @transform_3(%arg0: i32) -> (i32, i32) {
    %c0_i32 = arith.constant 0 : i32
    %c0_i32_0 = arith.constant 0 : i32
    %c0_i32_1 = arith.constant 0 : i32
    return %c0_i32, %c0_i32_0 : i32, i32
  }
  func.func @transform_4(%arg0: i32) -> (i32, i32) {
    %c0_i32 = arith.constant 0 : i32
    %c0_i32_0 = arith.constant 0 : i32
    %c0_i32_1 = arith.constant 0 : i32
    return %c0_i32, %c0_i32_0 : i32, i32
  }
}

</mosaic_0001>

<llo_original>
// kernel: lce_losses.1
$region0: #{lce_losses.1}
  #allocation0 [shape = 'u32[]', space=smem, size = 0x4, offset = 0x4, fixed_abs, tag = 'smem constant byte address 0x4 - core index']
  #allocation1 [shape = 'u32[144,128]{1,0:T(1,128)}', space=vmem, size = 0x12000, scoped, tag = 'internal scratch']
  #allocation2 [shape = 'f32[2]{0:T(128)}', space=smem, size = 0x200, scoped, tag = 'scratch operand']
  %s0 = inlined_call_operand.vmem [shape: f32[8,128], index: 0, kind: input, shape index: {}]
  %s1 = inlined_call_operand.vmem [shape: f32[8,1], index: 1, kind: input, shape index: {}]
  %s2 = inlined_call_operand.vmem [shape: s32[8,1], index: 2, kind: input, shape index: {}]
  %s3 = inlined_call_operand.hbm [shape: f32[1,1], index: 3, kind: output, shape index: {0}]
  %s4 = inlined_call_operand.hbm [shape: f32[1,1], index: 4, kind: output, shape index: {1}]
  %5 = xla_tuple %s3, %s4
  %s6 = sld [smem:[#allocation0]]
  $region38: #{lce_losses.1} parent=0
    _
  %s8 = ssub.s32 1, %s6
  %s9 = scalar_select 0, %s8, %s6
  $region1: #{lce_losses.1} parent=0
    #allocation3 [shape = 'u8[512]{0}', space=smem, size = 0x200, scoped, tag = 'output window, operand 0, single buffered']
    #allocation4 [shape = 's32[1]{0}', space=sflag, size = 0x4, scoped, tag = 'scoped memory for lce_losses.1']
    #allocation5 [shape = 'u8[512]{0}', space=smem, size = 0x200, scoped, tag = 'output window, operand 1, single buffered']
    #allocation6 [shape = 's32[1]{0}', space=sflag, size = 0x4, scoped, tag = 'scoped memory for lce_losses.1']
    %10 = vsyncpa [#allocation4], 0
    %11 = vsyncpa [#allocation6], 0
    // Predicated region
    $region2: #{lce_losses.1} parent=1 // pred_check
      _
    $region3: #{lce_losses.1} parent=1 // pred_check_branch
      %13 = sbr.rel (0) target = $region5
    $region4: #{lce_losses.1} parent=1 // pred_region
      _
    $region5: #{lce_losses.1} parent=1 // pred_fallthru
      _
    // Predicated region
    $region6: #{lce_losses.1} parent=1 // pred_check
      _
    $region7: #{lce_losses.1} parent=1 // pred_check_branch
      %15 = sbr.rel (0) target = $region9
    $region8: #{lce_losses.1} parent=1 // pred_region
      _
    $region9: #{lce_losses.1} parent=1 // pred_fallthru
      _
    // Predicated region
    $region10: #{lce_losses.1} parent=1 // pred_check
      _
    $region11: #{lce_losses.1} parent=1 // pred_check_branch
      %17 = sbr.rel (0) target = $region13
    $region12: #{lce_losses.1} parent=1 // pred_region
      _
    $region13: #{lce_losses.1} parent=1 // pred_fallthru
      _
    %p18 = scmp.eq.s32.totalorder 0, 0
    // Predicated region
    $region14: #{lce_losses.1} parent=1 // pred_check
      %p19 = pneg %p18
    $region15: #{lce_losses.1} parent=1 // pred_check_branch
      %21 = sbr.rel (%p19) target = $region17
    $region16: #{lce_losses.1} parent=1 // pred_region
      %s22 = scalar_lea.smem [#allocation2], 0
      %23 = sst [smem:[%s22]] 0.0
      %s24 = scalar_lea.smem [#allocation2], 1
      %25 = sst [smem:[%s24]] 0.0
    $region17: #{lce_losses.1} parent=1 // pred_fallthru
      _
    %v26 = vld [vmem:[%s0] sm:$0xff]
    %v27 = vld [vmem:[%s1] sm:$0xff]
    %v28 = vld [vmem:[%s2] sm:$0xff]
    %v29 = vlaneseq
    %v30 = vand.u32 %v29, 127
    %31 = vset.pattern.permute.xlu0 0
    %32 = vperm.xlu0 %31, %v28
    %v33 = vpop.permute.xlu0 %32
    %vm34 = vcmp.eq.s32.totalorder %v30, %v33
    %v35 = vsel %vm34, %v26, 0.0
    %36 = vadd.xlane.f32.xlu0 %v35
    %v37 = vpop.xlane.xlu0 %36
    %v38 = vmul.f32 %v27, %v37
    %v39 = vsub.f32 1.0, %v27
    %v40 = vadd.f32 %v38, %v39
    %s41 = smul.u32 0, 8
    %v42 = vlaneseq
    %v43 = vshrl.u32 %v42, 7
    %v44 = vstv %s41
    %v45 = vadd.s32 %v44, %v43
    %vm46 = vcmp.lt.s32.totalorder %v45, 8
    %v47 = vmax.f32 %v40, 1e-12
    %v48 = vsel %vm46, %v47, 1.0
    %v49 = vmax.f32 %v27, 1e-12
    %v50 = vsel %vm46, %v49, 1.0
    %s51 = sld [smem:[#allocation2]]
    %v52 = vlog2.pop %v48
    %v53 = vmul.f32 %v52, 0.6931472
    %v54 = vsub.f32 0.0, %v53
    %vm55 = vcmask 7168
    %v56 = vsel %vm55, %v54, 0.0
    %57 = vadd.xlane.f32.xlu0 %v56
    %v58 = vpop.xlane.xlu0 %57
    %v59 = vrot.slane %v58, 4
    %v60 = vadd.f32 %v58, %v59
    %v61 = vrot.slane %v60, 2
    %v62 = vadd.f32 %v60, %v61
    %v63 = vrot.slane %v62, 1
    %v64 = vadd.f32 %v62, %v63
    %s65 = vtos %v64
    %s66 = sadd.f32 %s51, %s65
    %s67 = scalar_lea.smem [#allocation2], 0
    %68 = sst [smem:[%s67]] %s66
    %s69 = sld [smem:[#allocation2 + $0x1]]
    %v70 = vlog2.pop %v50
    %v71 = vmul.f32 %v70, 0.6931472
    %v72 = vsub.f32 0.0, %v71
    %v73 = vsel %vm55, %v72, 0.0
    %74 = vadd.xlane.f32.xlu0 %v73
    %v75 = vpop.xlane.xlu0 %74
    %v76 = vrot.slane %v75, 4
    %v77 = vadd.f32 %v75, %v76
    %v78 = vrot.slane %v77, 2
    %v79 = vadd.f32 %v77, %v78
    %v80 = vrot.slane %v79, 1
    %v81 = vadd.f32 %v79, %v80
    %s82 = vtos %v81
    %s83 = sadd.f32 %s69, %s82
    %s84 = scalar_lea.smem [#allocation2], 1
    %85 = sst [smem:[%s84]] %s83
    // Predicated region
    $region18: #{lce_losses.1} parent=1 // pred_check
      %p86 = pneg %p18
    $region19: #{lce_losses.1} parent=1 // pred_check_branch
      %88 = sbr.rel (%p86) target = $region21
    $region20: #{lce_losses.1} parent=1 // pred_region
      %s89 = sld [smem:[#allocation2]]
      %s90 = smul.f32 %s89, 0.125
      %s91 = scalar_lea.smem [#allocation3], 0
      %92 = sst [smem:[%s91]] %s90
      %s93 = sld [smem:[#allocation2 + $0x1]]
      %s94 = smul.f32 %s93, 0.125
      %s95 = scalar_lea.smem [#allocation5], 0
      %96 = sst [smem:[%s95]] %s94
    $region21: #{lce_losses.1} parent=1 // pred_fallthru
      _
    // Predicated region
    $region22: #{lce_losses.1} parent=1 // pred_check
      _
    $region23: #{lce_losses.1} parent=1 // pred_check_branch
      %98 = sbr.rel (0) target = $region25
    $region24: #{lce_losses.1} parent=1 // pred_region
      %s100 = ssub.s32 16, 16
      %101 = vsyncadd [#allocation4], %s100
      %104 = dma.smem_to_hbm [#allocation3], 16, %s3, [#allocation4]
    $region25: #{lce_losses.1} parent=1 // pred_fallthru
      _
    // Predicated region
    $region26: #{lce_losses.1} parent=1 // pred_check
      _
    $region27: #{lce_losses.1} parent=1 // pred_check_branch
      %106 = sbr.rel (0) target = $region29
    $region28: #{lce_losses.1} parent=1 // pred_region
      %s108 = ssub.s32 16, 16
      %109 = vsyncadd [#allocation6], %s108
      %112 = dma.smem_to_hbm [#allocation5], 16, %s4, [#allocation6]
    $region29: #{lce_losses.1} parent=1 // pred_fallthru
      _
    // Predicated region
    $region30: #{lce_losses.1} parent=1 // pred_check
      _
    $region31: #{lce_losses.1} parent=1 // pred_check_branch
      %114 = sbr.rel (0) target = $region33
    $region32: #{lce_losses.1} parent=1 // pred_region
      %115 = dma.done [#allocation4], 16
    $region33: #{lce_losses.1} parent=1 // pred_fallthru
      _
    // Predicated region
    $region34: #{lce_losses.1} parent=1 // pred_check
      _
    $region35: #{lce_losses.1} parent=1 // pred_check_branch
      %117 = sbr.rel (0) target = $region37
    $region36: #{lce_losses.1} parent=1 // pred_region
      %118 = dma.done [#allocation6], 16
    $region37: #{lce_losses.1} parent=1 // pred_fallthru
      _
    %119 = sfence
    %120 = vsyncpa [#allocation4], 1
    %121 = vsyncpa [#allocation6], 1

</llo_original>
